<compile_context>
chip_gen: v5e
topology: v5e:2x2
jax: 0.10.0
libtpu: 0.0.40
codegen_flags: <defaults>
</compile_context>

<pallas_src>
import functools

import jax
import jax.numpy as jnp
from jax.experimental import pallas as pl
from jax.experimental.pallas import tpu as pltpu


LANE = 128           # pad the hidden dim to this so in-kernel activations are lane-dense
DEFAULT_TILE_M = 1024  # safe for v5e/v6e/v7x; sweep 1024-8192 per generation


def _round_up(v, m):
    return ((v + m - 1) // m) * m


def cppnet_kernel(x_ref, w1_ref, b1_ref, gamma_ref, beta_ref,
                  w2_ref, b2_ref, wh_ref, bh_ref,
                  out_ref, sum_ref, sumsq_ref,
                  *, z_dim, n_rows, tile_m):
    """Two-pass, batch-tiled forward.

    Grid = (2, n_tiles): axis 0 is the pass (0 = BN stats, 1 = apply+heads),
    axis 1 is the batch tile.  x_ref: (tile_m, input_dim) f32 (unpadded cols).
    Weights bf16, biases/gamma/beta f32, hidden dim zero-padded to 128 lanes.
    out_ref: (tile_m, 2*z_dim) f32 — cols [0, z_dim) = Z, [z_dim, 2*z_dim) = logits.
    """
    p = pl.program_id(0)       # pass
    i = pl.program_id(1)       # batch tile

    # Valid-row mask for the (possible) partial last tile.
    row = jax.lax.broadcasted_iota(jnp.int32, (tile_m, 1), 0) + i * tile_m
    valid = row < n_rows

    # Linear(input -> hidden): bf16 operands, f32 MXU accumulation.
    # Recomputed in both passes — re-reading x is cheaper than spilling h to HBM.
    h1 = jnp.dot(x_ref[...].astype(jnp.bfloat16), w1_ref[...],
                 preferred_element_type=jnp.float32) + b1_ref[...]

    @pl.when(p == 0)
    def _stats_pass():
        @pl.when(i == 0)
        def _():
            sum_ref[...] = jnp.zeros_like(sum_ref)
            sumsq_ref[...] = jnp.zeros_like(sumsq_ref)
        hm = jnp.where(valid, h1, 0.0)          # exclude garbage tail rows
        sum_ref[...] += jnp.sum(hm, axis=0, keepdims=True)
        sumsq_ref[...] += jnp.sum(hm * hm, axis=0, keepdims=True)

    @pl.when(p == 1)
    def _apply_pass():
        # ---- BatchNorm1d (full-batch stats, biased var, eps=1e-5), folded ----
        inv_n = 1.0 / n_rows
        mean = sum_ref[...] * inv_n
        var = jnp.maximum(sumsq_ref[...] * inv_n - mean * mean, 0.0)
        scale = gamma_ref[...] * jax.lax.rsqrt(var + 1e-5)   # (1, hid_p), EUP rsqrt
        shift = beta_ref[...] - mean * scale
        h = jnp.maximum(h1 * scale + shift, 0.0)             # BN + ReLU

        # ---- Linear(hidden -> hidden) + ReLU ----
        h = jnp.dot(h.astype(jnp.bfloat16), w2_ref[...],
                    preferred_element_type=jnp.float32) + b2_ref[...]
        h = jnp.maximum(h, 0.0)

        # ---- Fused heads: one MXU pass for [subspace | cluster] ----
        out = jnp.dot(h.astype(jnp.bfloat16), wh_ref[...],
                      preferred_element_type=jnp.float32) + bh_ref[...]

        # ---- F.normalize(p=2, dim=1, eps=1e-12) per head, via rsqrt ----
        col = jax.lax.broadcasted_iota(jnp.int32, out.shape, 1)
        is_z = col < z_dim
        sq = out * out
        ss_all = jnp.sum(sq, axis=1, keepdims=True)
        ss_z = jnp.sum(jnp.where(is_z, sq, 0.0), axis=1, keepdims=True)
        ss_l = ss_all - ss_z
        eps2 = 1e-24   # (1e-12)^2
        inv_z = jax.lax.rsqrt(jnp.maximum(ss_z, eps2))
        inv_l = jax.lax.rsqrt(jnp.maximum(ss_l, eps2))
        out_ref[...] = out * jnp.where(is_z, inv_z, inv_l)


def prepare_padded_params(params):
    """Pad the hidden dim to 128 lanes, fuse the two heads, cast matmul operands to bf16."""
    input_dim, hidden_dim = params["w1"].shape
    z_dim = params["ws"].shape[1]
    hid_p = _round_up(hidden_dim, LANE)

    def pad2(a, rows, cols):
        return jnp.pad(a, ((0, rows - a.shape[0]), (0, cols - a.shape[1])))

    wh = jnp.concatenate([params["ws"], params["wc"]], axis=1)   # (hidden, 2*z_dim)
    bh = jnp.concatenate([params["bs"], params["bc"]], axis=1)   # (1, 2*z_dim)

    padded = dict(
        w1=pad2(params["w1"], input_dim, hid_p).astype(jnp.bfloat16),
        b1=pad2(params["b1"], 1, hid_p),
        gamma=pad2(params["gamma"], 1, hid_p),
        beta=pad2(params["beta"], 1, hid_p),
        w2=pad2(params["w2"], hid_p, hid_p).astype(jnp.bfloat16),
        b2=pad2(params["b2"], 1, hid_p),
        wh=pad2(wh, hid_p, 2 * z_dim).astype(jnp.bfloat16),
        bh=bh,
    )
    dims = dict(input_dim=input_dim, hid_p=hid_p, z_dim=z_dim, out_w=2 * z_dim)
    return padded, dims


def cppnet_forward(x, padded_params, dims, tile_m=None):
    n, input_dim = x.shape
    hid_p, z_dim, out_w = dims["hid_p"], dims["z_dim"], dims["out_w"]
    assert input_dim == dims["input_dim"]

    # Batch tile size: multiple of 8 sublanes; sweep larger per generation
    # (v5e <=2048 by default scoped VMEM, v6e 4096-8192, v7x 1024-4096).
    if tile_m is None:
        tile_m = DEFAULT_TILE_M
    tile_m = _round_up(min(tile_m, _round_up(n, 8)), 8)
    n_tiles = pl.cdiv(n, tile_m)

    const = lambda shape: pl.BlockSpec(shape, lambda p, i: (0, 0))  # resident, DMA'd once

    grid_spec = pltpu.PrefetchScalarGridSpec(
        num_scalar_prefetch=0,
        grid=(2, n_tiles),                      # (pass, batch tile); tile axis fastest
        in_specs=[
            pl.BlockSpec((tile_m, input_dim), lambda p, i: (i, 0)),   # x, unpadded cols
            const((input_dim, hid_p)),          # w1
            const((1, hid_p)),                  # b1
            const((1, hid_p)),                  # gamma
            const((1, hid_p)),                  # beta
            const((hid_p, hid_p)),              # w2
            const((1, hid_p)),                  # b2
            const((hid_p, out_w)),              # wh (fused heads)
            const((1, out_w)),                  # bh
        ],
        # p*i keeps the output block pinned at 0 during the stats pass so the
        # (unwritten) buffer is never flushed; pass 1 writes each tile exactly once.
        out_specs=pl.BlockSpec((tile_m, out_w), lambda p, i: (p * i, 0)),
        scratch_shapes=[pltpu.VMEM((1, hid_p), jnp.float32),   # sum(h1)
                        pltpu.VMEM((1, hid_p), jnp.float32)],  # sum(h1^2)
    )

    flops = 2 * n * (2 * input_dim * hid_p + hid_p * hid_p + hid_p * out_w)
    bytes_accessed = (2 * n * input_dim * 4            # x streamed twice (f32)
                      + n * out_w * 4                  # fused output (f32)
                      + (input_dim * hid_p + hid_p * hid_p + hid_p * out_w) * 2
                      + 5 * hid_p * 4 + out_w * 4)

    fused = pl.pallas_call(
        functools.partial(cppnet_kernel, z_dim=z_dim, n_rows=n, tile_m=tile_m),
        out_shape=jax.ShapeDtypeStruct((n, out_w), jnp.float32),
        grid_spec=grid_spec,
        compiler_params=pltpu.CompilerParams(
            # Both axes "arbitrary": pass-0 tiles accumulate into, and pass-1 tiles
            # read from, the same stats scratch (full-batch BN).
            # TODO(synk): two-call split with per-tile partial stats would allow a
            # "parallel" tile axis for v7x megacore.
            dimension_semantics=("arbitrary", "arbitrary"),
            vmem_limit_bytes=32 * 1024 * 1024,   # plenty for TILE_M<=4096; raise when sweeping
        ),
        cost_estimate=pl.CostEstimate(flops=flops, transcendentals=2 * n + hid_p,
                                      bytes_accessed=bytes_accessed),
    )(x, padded_params["w1"], padded_params["b1"],
      padded_params["gamma"], padded_params["beta"],
      padded_params["w2"], padded_params["b2"],
      padded_params["wh"], padded_params["bh"])

    # Tiny (64 B/row) slices of the true-width slab.
    return fused[:, :z_dim], fused[:, z_dim:]


def init_params(key, input_dim, hidden_dim, z_dim):
    ks = jax.random.split(key, 8)

    def lin(kw, kb, fan_in, fan_out):
        bound = 1.0 / jnp.sqrt(fan_in)
        w = jax.random.uniform(kw, (fan_in, fan_out), jnp.float32, -bound, bound)
        b = jax.random.uniform(kb, (1, fan_out), jnp.float32, -bound, bound)
        return w, b

    w1, b1 = lin(ks[0], ks[1], input_dim, hidden_dim)
    w2, b2 = lin(ks[2], ks[3], hidden_dim, hidden_dim)
    ws, bs = lin(ks[4], ks[5], hidden_dim, z_dim)
    wc, bc = lin(ks[6], ks[7], hidden_dim, z_dim)
    gamma = jnp.ones((1, hidden_dim), jnp.float32)   # BatchNorm1d weight
    beta = jnp.zeros((1, hidden_dim), jnp.float32)   # BatchNorm1d bias
    return dict(w1=w1, b1=b1, gamma=gamma, beta=beta,
                w2=w2, b2=b2, ws=ws, bs=bs, wc=wc, bc=bc)


def reference_forward(x, p, *, matmul_dtype=jnp.float32):
    """Plain-JAX reference. matmul_dtype=bf16 mirrors the kernel's MXU operands."""
    def mm(a, b):
        return jnp.dot(a.astype(matmul_dtype), b.astype(matmul_dtype),
                       preferred_element_type=jnp.float32)

    h = mm(x, p["w1"]) + p["b1"]
    mean = jnp.mean(h, axis=0, keepdims=True)
    var = jnp.mean((h - mean) ** 2, axis=0, keepdims=True)
    h = (h - mean) / jnp.sqrt(var + 1e-5) * p["gamma"] + p["beta"]
    h = jnp.maximum(h, 0.0)
    h = jnp.maximum(mm(h, p["w2"]) + p["b2"], 0.0)
    z = mm(h, p["ws"]) + p["bs"]
    logits = mm(h, p["wc"]) + p["bc"]
    z = z / jnp.maximum(jnp.linalg.norm(z, axis=1, keepdims=True), 1e-12)
    logits = logits / jnp.maximum(jnp.linalg.norm(logits, axis=1, keepdims=True), 1e-12)
    return z, logits


def _check(z, logits, x, params):
    z_bf, l_bf = reference_forward(x, params, matmul_dtype=jnp.bfloat16)
    assert jnp.allclose(z, z_bf, atol=2e-3), "Z mismatch vs bf16-matched reference"
    assert jnp.allclose(logits, l_bf, atol=2e-3), "logits mismatch vs bf16-matched reference"
    z_f32, l_f32 = reference_forward(x, params)
    assert jnp.allclose(z, z_f32, atol=5e-2), "Z drift vs f32 reference"
    assert jnp.allclose(logits, l_f32, atol=5e-2), "logits drift vs f32 reference"
    assert jnp.allclose(jnp.linalg.norm(z, axis=1), 1.0, atol=1e-3)
    assert jnp.allclose(jnp.linalg.norm(logits, axis=1), 1.0, atol=1e-3)


if __name__ == "__main__":
    input_dim, hidden_dim, z_dim = 16, 32, 8

    key = jax.random.PRNGKey(0)
    kx, kp, kx2 = jax.random.split(key, 3)
    params = init_params(kp, input_dim, hidden_dim, z_dim)
    padded_params, dims = prepare_padded_params(params)

    # Case 1: small batch, single tile (latency regime).
    x = jax.random.normal(kx, (8, input_dim), jnp.float32)
    z, logits = cppnet_forward(x, padded_params, dims)
    jax.block_until_ready((z, logits))
    _check(z, logits, x, params)

    # Case 2: multi-tile grid with a partial tail tile — exercises the two-pass,
    # full-batch BatchNorm accumulation and tail-row masking.
    x2 = jax.random.normal(kx2, (20, input_dim), jnp.float32)
    z2, logits2 = cppnet_forward(x2, padded_params, dims, tile_m=8)
    jax.block_until_ready((z2, logits2))
    _check(z2, logits2, x2, params)

    print("KERNEL_OK")
</pallas_src>

<mosaic_0001>
module attributes {stable_mosaic.version = 11 : i64} {
  func.func @cppnet_kernel(%arg0: i32, %arg1: i32, %arg2: memref<8x16xf32, #tpu.memory_space<vmem>>, %arg3: memref<16x128xbf16, #tpu.memory_space<vmem>>, %arg4: memref<1x128xf32, #tpu.memory_space<vmem>>, %arg5: memref<1x128xf32, #tpu.memory_space<vmem>>, %arg6: memref<1x128xf32, #tpu.memory_space<vmem>>, %arg7: memref<128x128xbf16, #tpu.memory_space<vmem>>, %arg8: memref<1x128xf32, #tpu.memory_space<vmem>>, %arg9: memref<128x16xbf16, #tpu.memory_space<vmem>>, %arg10: memref<1x16xf32, #tpu.memory_space<vmem>>, %arg11: memref<8x16xf32, #tpu.memory_space<vmem>>, %arg12: memref<1x128xf32, #tpu.memory_space<vmem>>, %arg13: memref<1x128xf32, #tpu.memory_space<vmem>>) attributes {dimension_semantics = [#tpu.dimension_semantics<arbitrary>, #tpu.dimension_semantics<arbitrary>], iteration_bounds = array<i64: 2, 1>, scalar_prefetch = 0 : i64, scratch_operands = 2 : i64, tpu.core_type = #tpu.core_type<tc>, window_params = [{transform_indices = @transform_0, window_bounds = array<i64: 8, 16>}, {pipeline_mode = #tpu.pipeline_mode<synchronous>, transform_indices = @transform_1, window_bounds = array<i64: 16, 128>}, {pipeline_mode = #tpu.pipeline_mode<synchronous>, transform_indices = @transform_2, window_bounds = array<i64: 1, 128>}, {pipeline_mode = #tpu.pipeline_mode<synchronous>, transform_indices = @transform_3, window_bounds = array<i64: 1, 128>}, {pipeline_mode = #tpu.pipeline_mode<synchronous>, transform_indices = @transform_4, window_bounds = array<i64: 1, 128>}, {pipeline_mode = #tpu.pipeline_mode<synchronous>, transform_indices = @transform_5, window_bounds = array<i64: 128, 128>}, {pipeline_mode = #tpu.pipeline_mode<synchronous>, transform_indices = @transform_6, window_bounds = array<i64: 1, 128>}, {pipeline_mode = #tpu.pipeline_mode<synchronous>, transform_indices = @transform_7, window_bounds = array<i64: 128, 16>}, {pipeline_mode = #tpu.pipeline_mode<synchronous>, transform_indices = @transform_8, window_bounds = array<i64: 1, 16>}, {transform_indices = @transform_9, window_bounds = array<i64: 8, 16>}]} {
    %0 = tpu.iota {dimensions = array<i32: 0>} : vector<8x1xi32>
    %c8_i32 = arith.constant 8 : i32
    %1 = arith.muli %arg1, %c8_i32 : i32
    %2 = vector.broadcast %1 : i32 to vector<8x1xi32>
    %3 = arith.addi %0, %2 : vector<8x1xi32>
    %c8_i32_0 = arith.constant 8 : i32
    %4 = vector.broadcast %c8_i32_0 : i32 to vector<8x1xi32>
    %5 = arith.cmpi slt, %3, %4 : vector<8x1xi32>
    %c0 = arith.constant 0 : index
    %c0_1 = arith.constant 0 : index
    %6 = vector.load %arg2[%c0, %c0_1] : memref<8x16xf32, #tpu.memory_space<vmem>>, vector<8x16xf32>
    %7 = arith.truncf %6 : vector<8x16xf32> to vector<8x16xbf16>
    %c0_2 = arith.constant 0 : index
    %c0_3 = arith.constant 0 : index
    %8 = vector.load %arg3[%c0_2, %c0_3] : memref<16x128xbf16, #tpu.memory_space<vmem>>, vector<16x128xbf16>
    %cst = arith.constant dense<0.000000e+00> : vector<8x128xf32>
    %9 = tpu.matmul %7, %8, %cst {dimension_numbers = #tpu.dot_dimension_numbers<[1], [0], [0], [1], [0, 0, 1, 1], [], []>} : vector<8x16xbf16>, vector<16x128xbf16>, vector<8x128xf32> -> vector<8x128xf32>
    %c0_4 = arith.constant 0 : index
    %c0_5 = arith.constant 0 : index
    %10 = vector.load %arg4[%c0_4, %c0_5] : memref<1x128xf32, #tpu.memory_space<vmem>>, vector<1x128xf32>
    %11 = vector.broadcast %10 : vector<1x128xf32> to vector<8x128xf32>
    %12 = arith.addf %9, %11 : vector<8x128xf32>
    %c0_i32 = arith.constant 0 : i32
    %13 = arith.cmpi eq, %arg0, %c0_i32 : i32
    %14 = arith.extui %13 : i1 to i32
    %c0_i32_6 = arith.constant 0 : i32
    %15 = arith.cmpi ne, %14, %c0_i32_6 : i32
    scf.if %15 {
      %c0_i32_8 = arith.constant 0 : i32
      %19 = arith.cmpi eq, %arg1, %c0_i32_8 : i32
      %20 = arith.extui %19 : i1 to i32
      %c0_i32_9 = arith.constant 0 : i32
      %21 = arith.cmpi ne, %20, %c0_i32_9 : i32
      scf.if %21 {
        %cst_21 = arith.constant 0.000000e+00 : f32
        %37 = vector.broadcast %cst_21 : f32 to vector<1x128xf32>
        %c0_22 = arith.constant 0 : index
        %c0_23 = arith.constant 0 : index
        %38 = vector.load %arg12[%c0_22, %c0_23] : memref<1x128xf32, #tpu.memory_space<vmem>>, vector<1x128xf32>
        tpu.vector_store %arg12[%c0_22, %c0_23], %37 {strides = array<i32>} : memref<1x128xf32, #tpu.memory_space<vmem>>, vector<1x128xf32>,
        %cst_24 = arith.constant 0.000000e+00 : f32
        %39 = vector.broadcast %cst_24 : f32 to vector<1x128xf32>
        %c0_25 = arith.constant 0 : index
        %c0_26 = arith.constant 0 : index
        %40 = vector.load %arg13[%c0_25, %c0_26] : memref<1x128xf32, #tpu.memory_space<vmem>>, vector<1x128xf32>
        tpu.vector_store %arg13[%c0_25, %c0_26], %39 {strides = array<i32>} : memref<1x128xf32, #tpu.memory_space<vmem>>, vector<1x128xf32>,
      } else {
      }
      %cst_10 = arith.constant 0.000000e+00 : f32
      %22 = vector.shape_cast %5 : vector<8x1xi1> to vector<8x1xi1>
      %23 = vector.broadcast %22 : vector<8x1xi1> to vector<8x128xi1>
      %24 = vector.broadcast %cst_10 : f32 to vector<8x128xf32>
      %25 = arith.select %23, %12, %24 : vector<8x128xi1>, vector<8x128xf32>
      %c0_11 = arith.constant 0 : index
      %c0_12 = arith.constant 0 : index
      %26 = vector.load %arg12[%c0_11, %c0_12] : memref<1x128xf32, #tpu.memory_space<vmem>>, vector<1x128xf32>
      %cst_13 = arith.constant dense<0.000000e+00> : vector<128xf32>
      %27 = vector.multi_reduction <add>, %25, %cst_13 [0] : vector<8x128xf32> to vector<128xf32>
      %28 = vector.shape_cast %27 : vector<128xf32> to vector<1x128xf32>
      %29 = arith.addf %26, %28 : vector<1x128xf32>
      %c0_14 = arith.constant 0 : index
      %c0_15 = arith.constant 0 : index
      %30 = vector.load %arg12[%c0_14, %c0_15] : memref<1x128xf32, #tpu.memory_space<vmem>>, vector<1x128xf32>
      tpu.vector_store %arg12[%c0_14, %c0_15], %29 {strides = array<i32>} : memref<1x128xf32, #tpu.memory_space<vmem>>, vector<1x128xf32>,
      %c0_16 = arith.constant 0 : index
      %c0_17 = arith.constant 0 : index
      %31 = vector.load %arg13[%c0_16, %c0_17] : memref<1x128xf32, #tpu.memory_space<vmem>>, vector<1x128xf32>
      %32 = arith.mulf %25, %25 : vector<8x128xf32>
      %cst_18 = arith.constant dense<0.000000e+00> : vector<128xf32>
      %33 = vector.multi_reduction <add>, %32, %cst_18 [0] : vector<8x128xf32> to vector<128xf32>
      %34 = vector.shape_cast %33 : vector<128xf32> to vector<1x128xf32>
      %35 = arith.addf %31, %34 : vector<1x128xf32>
      %c0_19 = arith.constant 0 : index
      %c0_20 = arith.constant 0 : index
      %36 = vector.load %arg13[%c0_19, %c0_20] : memref<1x128xf32, #tpu.memory_space<vmem>>, vector<1x128xf32>
      tpu.vector_store %arg13[%c0_19, %c0_20], %35 {strides = array<i32>} : memref<1x128xf32, #tpu.memory_space<vmem>>, vector<1x128xf32>,
    } else {
    }
    %c1_i32 = arith.constant 1 : i32
    %16 = arith.cmpi eq, %arg0, %c1_i32 : i32
    %17 = arith.extui %16 : i1 to i32
    %c0_i32_7 = arith.constant 0 : i32
    %18 = arith.cmpi ne, %17, %c0_i32_7 : i32
    scf.if %18 {
      %c0_8 = arith.constant 0 : index
      %c0_9 = arith.constant 0 : index
      %19 = vector.load %arg12[%c0_8, %c0_9] : memref<1x128xf32, #tpu.memory_space<vmem>>, vector<1x128xf32>
      %cst_10 = arith.constant 1.250000e-01 : f32
      %20 = vector.broadcast %cst_10 : f32 to vector<1x128xf32>
      %21 = arith.mulf %19, %20 : vector<1x128xf32>
      %c0_11 = arith.constant 0 : index
      %c0_12 = arith.constant 0 : index
      %22 = vector.load %arg13[%c0_11, %c0_12] : memref<1x128xf32, #tpu.memory_space<vmem>>, vector<1x128xf32>
      %cst_13 = arith.constant 1.250000e-01 : f32
      %23 = vector.broadcast %cst_13 : f32 to vector<1x128xf32>
      %24 = arith.mulf %22, %23 : vector<1x128xf32>
      %25 = arith.mulf %21, %21 : vector<1x128xf32>
      %26 = arith.subf %24, %25 : vector<1x128xf32>
      %cst_14 = arith.constant 0.000000e+00 : f32
      %27 = vector.broadcast %cst_14 : f32 to vector<1x128xf32>
      %28 = arith.maximumf %26, %27 : vector<1x128xf32>
      %c0_15 = arith.constant 0 : index
      %c0_16 = arith.constant 0 : index
      %29 = vector.load %arg5[%c0_15, %c0_16] : memref<1x128xf32, #tpu.memory_space<vmem>>, vector<1x128xf32>
      %cst_17 = arith.constant 9.99999974E-6 : f32
      %30 = vector.broadcast %cst_17 : f32 to vector<1x128xf32>
      %31 = arith.addf %28, %30 : vector<1x128xf32>
      %32 = math.rsqrt %31 : vector<1x128xf32>
      %33 = arith.mulf %29, %32 : vector<1x128xf32>
      %c0_18 = arith.constant 0 : index
      %c0_19 = arith.constant 0 : index
      %34 = vector.load %arg6[%c0_18, %c0_19] : memref<1x128xf32, #tpu.memory_space<vmem>>, vector<1x128xf32>
      %35 = arith.mulf %21, %33 : vector<1x128xf32>
      %36 = arith.subf %34, %35 : vector<1x128xf32>
      %37 = vector.broadcast %33 : vector<1x128xf32> to vector<8x128xf32>
      %38 = arith.mulf %12, %37 : vector<8x128xf32>
      %39 = vector.broadcast %36 : vector<1x128xf32> to vector<8x128xf32>
      %40 = arith.addf %38, %39 : vector<8x128xf32>
      %cst_20 = arith.constant 0.000000e+00 : f32
      %41 = vector.broadcast %cst_20 : f32 to vector<8x128xf32>
      %42 = arith.maximumf %40, %41 : vector<8x128xf32>
      %43 = arith.truncf %42 : vector<8x128xf32> to vector<8x128xbf16>
      %c0_21 = arith.constant 0 : index
      %c0_22 = arith.constant 0 : index
      %44 = vector.load %arg7[%c0_21, %c0_22] : memref<128x128xbf16, #tpu.memory_space<vmem>>, vector<128x128xbf16>
      %cst_23 = arith.constant dense<0.000000e+00> : vector<8x128xf32>
      %45 = tpu.matmul %43, %44, %cst_23 {dimension_numbers = #tpu.dot_dimension_numbers<[1], [0], [0], [1], [0, 0, 1, 1], [], []>} : vector<8x128xbf16>, vector<128x128xbf16>, vector<8x128xf32> -> vector<8x128xf32>
      %c0_24 = arith.constant 0 : index
      %c0_25 = arith.constant 0 : index
      %46 = vector.load %arg8[%c0_24, %c0_25] : memref<1x128xf32, #tpu.memory_space<vmem>>, vector<1x128xf32>
      %47 = vector.broadcast %46 : vector<1x128xf32> to vector<8x128xf32>
      %48 = arith.addf %45, %47 : vector<8x128xf32>
      %cst_26 = arith.constant 0.000000e+00 : f32
      %49 = vector.broadcast %cst_26 : f32 to vector<8x128xf32>
      %50 = arith.maximumf %48, %49 : vector<8x128xf32>
      %51 = arith.truncf %50 : vector<8x128xf32> to vector<8x128xbf16>
      %c0_27 = arith.constant 0 : index
      %c0_28 = arith.constant 0 : index
      %52 = vector.load %arg9[%c0_27, %c0_28] : memref<128x16xbf16, #tpu.memory_space<vmem>>, vector<128x16xbf16>
      %cst_29 = arith.constant dense<0.000000e+00> : vector<8x16xf32>
      %53 = tpu.matmul %51, %52, %cst_29 {dimension_numbers = #tpu.dot_dimension_numbers<[1], [0], [0], [1], [0, 0, 1, 1], [], []>} : vector<8x128xbf16>, vector<128x16xbf16>, vector<8x16xf32> -> vector<8x16xf32>
      %c0_30 = arith.constant 0 : index
      %c0_31 = arith.constant 0 : index
      %54 = vector.load %arg10[%c0_30, %c0_31] : memref<1x16xf32, #tpu.memory_space<vmem>>, vector<1x16xf32>
      %55 = vector.broadcast %54 : vector<1x16xf32> to vector<8x16xf32>
      %56 = arith.addf %53, %55 : vector<8x16xf32>
      %57 = tpu.iota {dimensions = array<i32: 1>} : vector<8x16xi32>
      %c8_i32_32 = arith.constant 8 : i32
      %58 = vector.broadcast %c8_i32_32 : i32 to vector<8x16xi32>
      %59 = arith.cmpi slt, %57, %58 : vector<8x16xi32>
      %60 = arith.mulf %56, %56 : vector<8x16xf32>
      %cst_33 = arith.constant dense<0.000000e+00> : vector<8xf32>
      %61 = vector.multi_reduction <add>, %60, %cst_33 [1] : vector<8x16xf32> to vector<8xf32>
      %62 = vector.shape_cast %61 : vector<8xf32> to vector<8x1xf32>
      %cst_34 = arith.constant 0.000000e+00 : f32
      %63 = vector.broadcast %cst_34 : f32 to vector<8x16xf32>
      %64 = arith.select %59, %60, %63 : vector<8x16xi1>, vector<8x16xf32>
      %cst_35 = arith.constant dense<0.000000e+00> : vector<8xf32>
      %65 = vector.multi_reduction <add>, %64, %cst_35 [1] : vector<8x16xf32> to vector<8xf32>
      %66 = vector.shape_cast %65 : vector<8xf32> to vector<8x1xf32>
      %67 = arith.subf %62, %66 : vector<8x1xf32>
      %cst_36 = arith.constant 1.000000e-24 : f32
      %68 = vector.broadcast %cst_36 : f32 to vector<8x1xf32>
      %69 = arith.maximumf %66, %68 : vector<8x1xf32>
      %70 = math.rsqrt %69 : vector<8x1xf32>
      %cst_37 = arith.constant 1.000000e-24 : f32
      %71 = vector.broadcast %cst_37 : f32 to vector<8x1xf32>
      %72 = arith.maximumf %67, %71 : vector<8x1xf32>
      %73 = math.rsqrt %72 : vector<8x1xf32>
      %74 = vector.shape_cast %70 : vector<8x1xf32> to vector<8x1xf32>
      %75 = vector.broadcast %74 : vector<8x1xf32> to vector<8x16xf32>
      %76 = vector.shape_cast %73 : vector<8x1xf32> to vector<8x1xf32>
      %77 = vector.broadcast %76 : vector<8x1xf32> to vector<8x16xf32>
      %78 = arith.select %59, %75, %77 : vector<8x16xi1>, vector<8x16xf32>
      %79 = arith.mulf %56, %78 : vector<8x16xf32>
      %c0_38 = arith.constant 0 : index
      %c0_39 = arith.constant 0 : index
      %80 = vector.load %arg11[%c0_38, %c0_39] : memref<8x16xf32, #tpu.memory_space<vmem>>, vector<8x16xf32>
      tpu.vector_store %arg11[%c0_38, %c0_39], %79 {strides = array<i32>} : memref<8x16xf32, #tpu.memory_space<vmem>>, vector<8x16xf32>,
    } else {
    }
    return
  }
  func.func @transform_0(%arg0: i32, %arg1: i32) -> (i32, i32) {
    %c0_i32 = arith.constant 0 : i32
    %c0_i32_0 = arith.constant 0 : i32
    return %arg1, %c0_i32 : i32, i32
  }
  func.func @transform_1(%arg0: i32, %arg1: i32) -> (i32, i32) {
    %c0_i32 = arith.constant 0 : i32
    %c0_i32_0 = arith.constant 0 : i32
    %c0_i32_1 = arith.constant 0 : i32
    return %c0_i32, %c0_i32_0 : i32, i32
  }
  func.func @transform_2(%arg0: i32, %arg1: i32) -> (i32, i32) {
    %c0_i32 = arith.constant 0 : i32
    %c0_i32_0 = arith.constant 0 : i32
    %c0_i32_1 = arith.constant 0 : i32
    return %c0_i32, %c0_i32_0 : i32, i32
  }
  func.func @transform_3(%arg0: i32, %arg1: i32) -> (i32, i32) {
    %c0_i32 = arith.constant 0 : i32
    %c0_i32_0 = arith.constant 0 : i32
    %c0_i32_1 = arith.constant 0 : i32
    return %c0_i32, %c0_i32_0 : i32, i32
  }
  func.func @transform_4(%arg0: i32, %arg1: i32) -> (i32, i32) {
    %c0_i32 = arith.constant 0 : i32
    %c0_i32_0 = arith.constant 0 : i32
    %c0_i32_1 = arith.constant 0 : i32
    return %c0_i32, %c0_i32_0 : i32, i32
  }
  func.func @transform_5(%arg0: i32, %arg1: i32) -> (i32, i32) {
    %c0_i32 = arith.constant 0 : i32
    %c0_i32_0 = arith.constant 0 : i32
    %c0_i32_1 = arith.constant 0 : i32
    return %c0_i32, %c0_i32_0 : i32, i32
  }
  func.func @transform_6(%arg0: i32, %arg1: i32) -> (i32, i32) {
    %c0_i32 = arith.constant 0 : i32
    %c0_i32_0 = arith.constant 0 : i32
    %c0_i32_1 = arith.constant 0 : i32
    return %c0_i32, %c0_i32_0 : i32, i32
  }
  func.func @transform_7(%arg0: i32, %arg1: i32) -> (i32, i32) {
    %c0_i32 = arith.constant 0 : i32
    %c0_i32_0 = arith.constant 0 : i32
    %c0_i32_1 = arith.constant 0 : i32
    return %c0_i32, %c0_i32_0 : i32, i32
  }
  func.func @transform_8(%arg0: i32, %arg1: i32) -> (i32, i32) {
    %c0_i32 = arith.constant 0 : i32
    %c0_i32_0 = arith.constant 0 : i32
    %c0_i32_1 = arith.constant 0 : i32
    return %c0_i32, %c0_i32_0 : i32, i32
  }
  func.func @transform_9(%arg0: i32, %arg1: i32) -> (i32, i32) {
    %0 = arith.muli %arg0, %arg1 : i32
    %c0_i32 = arith.constant 0 : i32
    %c0_i32_0 = arith.constant 0 : i32
    return %0, %c0_i32 : i32, i32
  }
}

</mosaic_0001>

<llo_original>
// kernel: tpu_custom_call.1
$region0: #{tpu_custom_call.1}
  #allocation0 [shape = 'u32[]', space=smem, size = 0x4, offset = 0x4, fixed_abs, tag = 'smem constant byte address 0x4 - core index']
  #allocation1 [shape = 'u32[72,128]{1,0:T(1,128)}', space=vmem, size = 0x9000, scoped, tag = 'internal scratch']
  #allocation2 [shape = 'f32[1,128]{1,0:T(1,128)}', space=vmem, size = 0x200, scoped, tag = 'scratch operand']
  #allocation3 [shape = 'f32[1,128]{1,0:T(1,128)}', space=vmem, size = 0x200, scoped, tag = 'scratch operand']
  %s0 = inlined_call_operand.vmem [shape: f32[8,16], index: 0, kind: input, shape index: {}]
  %s1 = inlined_call_operand.hbm [shape: bf16[16,128], index: 1, kind: input, shape index: {}]
  %s2 = inlined_call_operand.vmem [shape: f32[1,128], index: 2, kind: input, shape index: {}]
  %s3 = inlined_call_operand.vmem [shape: f32[1,128], index: 3, kind: input, shape index: {}]
  %s4 = inlined_call_operand.vmem [shape: f32[1,128], index: 4, kind: input, shape index: {}]
  %s5 = inlined_call_operand.vmem [shape: bf16[128,128], index: 5, kind: input, shape index: {}]
  %s6 = inlined_call_operand.vmem [shape: f32[1,128], index: 6, kind: input, shape index: {}]
  %s7 = inlined_call_operand.vmem [shape: bf16[128,16], index: 7, kind: input, shape index: {}]
  %s8 = inlined_call_operand.vmem [shape: f32[1,16], index: 8, kind: input, shape index: {}]
  %s9 = inlined_call_operand.hbm [shape: f32[8,16], index: 9, kind: output, shape index: {}]
  %s10 = sld [smem:[#allocation0]]
  $region85: #{tpu_custom_call.1} parent=0
    _
  %s12 = ssub.s32 1, %s10
  %s13 = scalar_select 0, %s12, %s10
  $region1: #{tpu_custom_call.1} parent=0
    #allocation4 [shape = 'u8[4096]{0}', space=vmem, size = 0x1000, scoped, tag = 'input window, operand 1, single buffered']
    #allocation5 [shape = 's32[2]{0}', space=sflag, size = 0x8, scoped, tag = 'scoped memory for tpu_custom_call.1']
    #allocation6 [shape = 's32[2]{0}', space=sflag, size = 0x8, scoped, tag = 'scoped memory for tpu_custom_call.1']
    #allocation7 [shape = 'u8[8192]{0}', space=vmem, size = 0x2000, scoped, tag = 'output window, operand 0']
    %14 = vsyncpa [#allocation5], 0
    %15 = vsyncpa [#allocation6], 0
    %s16 = scalar_lea.sflag [#allocation6], 1
    %17 = vsyncpa %s16, 0
    loop: start=0, step=1, limit=4
    $region2: #{tpu_custom_call.1} parent=1 // loop_pre_header
      _
    $region3: #{tpu_custom_call.1} parent=1 // loop_header
      %s19 = sphi 0, %s23
      %p20 = scmp.ge.s32.totalorder %s19, 4
      %s26 = sphi 0, %s38
      %s27 = sphi 0, %s34
      %s28 = sphi 0, %s26
      %s29 = sphi 0, %s27
      %s30 = sphi 0, %s28
      %s31 = sphi 0, %s29
      %s41 = sphi 0, %s43
      %s44 = sphi 0, %s41
      %s45 = sphi 0, %s44
      %s61 = sphi 0, %s45
      %s65 = sphi 0, %s65
      %s67 = sphi 0, %s65
      %s68 = sphi 0, %s67
      %s82 = sphi 0, %s68
      %s86 = sphi 0, %s86
      %s88 = sphi 0, %s86
      %s89 = sphi 0, %s88
      %s103 = sphi 0, %s89
      %s107 = sphi 0, %s107
      %s109 = sphi 0, %s107
      %s110 = sphi 0, %s109
      %s124 = sphi 0, %s110
      %s128 = sphi 0, %s128
      %s130 = sphi 0, %s128
      %s131 = sphi 0, %s130
      %s145 = sphi 0, %s131
      %s149 = sphi 0, %s149
      %s151 = sphi 0, %s149
      %s152 = sphi 0, %s151
      %s166 = sphi 0, %s152
      %s170 = sphi 0, %s170
      %s172 = sphi 0, %s170
      %s173 = sphi 0, %s172
      %s187 = sphi 0, %s173
      %s191 = sphi 0, %s191
      %s193 = sphi 0, %s191
      %s194 = sphi 0, %s193
      %s208 = sphi 0, %s194
      %s212 = sphi 0, %s212
      %s214 = sphi 0, %s212
      %s215 = sphi 0, %s214
      %s229 = sphi 0, %s215
      %s237 = sphi 0, %s239
      %s240 = sphi 0, %s237
      %s241 = sphi 0, %s240
      %s257 = sphi 0, %s241
    $region4: #{tpu_custom_call.1} parent=1 // loop_header_branch
      %22 = sbr.rel (%p20) target = $region8
    $region5: #{tpu_custom_call.1} parent=1 // loop_body
      %s24 = ssub.s32 %s19, 1
      %s25 = ssub.s32 %s19, 2
      %s32 = sadd.s32 1, %s27
      %p33 = scmp.ge.s32.totalorder %s32, 1
      %s34 = scalar_select %p33, 0, %s32
      %s35 = sadd.s32 1, %s26
      %s36 = scalar_select %p33, %s35, %s26
      %p37 = scmp.ge.s32.totalorder %s36, 2
      %s38 = scalar_select %p37, 0, %s36
      %s39 = ssub.s32 %s27, %s34
      %p40 = scmp.eq.s32.totalorder %s39, 0
      %s42 = sadd.s32 %s41, 1
      %s43 = scalar_select %p40, %s41, %s42
      %p46 = pneg %p40
      %p47 = scmp.eq.s32.totalorder %s19, 1
      %p48 = por %p46, %p47
      %p49 = scmp.ne.s32.totalorder %s41, %s44
      %p50 = scmp.eq.s32.totalorder %s19, 0
      %p51 = por %p49, %p50
      %p52 = scmp.ne.s32.totalorder %s41, %s44
      %p53 = scmp.eq.s32.totalorder %s24, 1
      %p54 = por %p52, %p53
      %p55 = scmp.ne.s32.totalorder %s44, %s45
      %p56 = scmp.eq.s32.totalorder %s24, 0
      %p57 = por %p55, %p56
      %p58 = scmp.ne.s32.totalorder %s44, %s45
      %p59 = scmp.eq.s32.totalorder %s25, 1
      %p60 = por %p58, %p59
      %p62 = scmp.ne.s32.totalorder %s45, %s61
      %p63 = scmp.eq.s32.totalorder %s25, 0
      %p64 = por %p62, %p63
      %s66 = sadd.s32 %s65, 1
      %p69 = scmp.eq.s32.totalorder %s19, 1
      %p70 = scmp.ne.s32.totalorder %s65, %s67
      %p71 = scmp.eq.s32.totalorder %s19, 0
      %p72 = por %p70, %p71
      %p73 = scmp.ne.s32.totalorder %s65, %s67
      %p74 = scmp.eq.s32.totalorder %s24, 1
      %p75 = por %p73, %p74
      %p76 = scmp.ne.s32.totalorder %s67, %s68
      %p77 = scmp.eq.s32.totalorder %s24, 0
      %p78 = por %p76, %p77
      %p79 = scmp.ne.s32.totalorder %s67, %s68
      %p80 = scmp.eq.s32.totalorder %s25, 1
      %p81 = por %p79, %p80
      %p83 = scmp.ne.s32.totalorder %s68, %s82
      %p84 = scmp.eq.s32.totalorder %s25, 0
      %p85 = por %p83, %p84
      %s87 = sadd.s32 %s86, 1
      %p90 = scmp.eq.s32.totalorder %s19, 1
      %p91 = scmp.ne.s32.totalorder %s86, %s88
      %p92 = scmp.eq.s32.totalorder %s19, 0
      %p93 = por %p91, %p92
      %p94 = scmp.ne.s32.totalorder %s86, %s88
      %p95 = scmp.eq.s32.totalorder %s24, 1
      %p96 = por %p94, %p95
      %p97 = scmp.ne.s32.totalorder %s88, %s89
      %p98 = scmp.eq.s32.totalorder %s24, 0
      %p99 = por %p97, %p98
      %p100 = scmp.ne.s32.totalorder %s88, %s89
      %p101 = scmp.eq.s32.totalorder %s25, 1
      %p102 = por %p100, %p101
      %p104 = scmp.ne.s32.totalorder %s89, %s103
      %p105 = scmp.eq.s32.totalorder %s25, 0
      %p106 = por %p104, %p105
      %s108 = sadd.s32 %s107, 1
      %p111 = scmp.eq.s32.totalorder %s19, 1
      %p112 = scmp.ne.s32.totalorder %s107, %s109
      %p113 = scmp.eq.s32.totalorder %s19, 0
      %p114 = por %p112, %p113
      %p115 = scmp.ne.s32.totalorder %s107, %s109
      %p116 = scmp.eq.s32.totalorder %s24, 1
      %p117 = por %p115, %p116
      %p118 = scmp.ne.s32.totalorder %s109, %s110
      %p119 = scmp.eq.s32.totalorder %s24, 0
      %p120 = por %p118, %p119
      %p121 = scmp.ne.s32.totalorder %s109, %s110
      %p122 = scmp.eq.s32.totalorder %s25, 1
      %p123 = por %p121, %p122
      %p125 = scmp.ne.s32.totalorder %s110, %s124
      %p126 = scmp.eq.s32.totalorder %s25, 0
      %p127 = por %p125, %p126
      %s129 = sadd.s32 %s128, 1
      %p132 = scmp.eq.s32.totalorder %s19, 1
      %p133 = scmp.ne.s32.totalorder %s128, %s130
      %p134 = scmp.eq.s32.totalorder %s19, 0
      %p135 = por %p133, %p134
      %p136 = scmp.ne.s32.totalorder %s128, %s130
      %p137 = scmp.eq.s32.totalorder %s24, 1
      %p138 = por %p136, %p137
      %p139 = scmp.ne.s32.totalorder %s130, %s131
      %p140 = scmp.eq.s32.totalorder %s24, 0
      %p141 = por %p139, %p140
      %p142 = scmp.ne.s32.totalorder %s130, %s131
      %p143 = scmp.eq.s32.totalorder %s25, 1
      %p144 = por %p142, %p143
      %p146 = scmp.ne.s32.totalorder %s131, %s145
      %p147 = scmp.eq.s32.totalorder %s25, 0
      %p148 = por %p146, %p147
      %s150 = sadd.s32 %s149, 1
      %p153 = scmp.eq.s32.totalorder %s19, 1
      %p154 = scmp.ne.s32.totalorder %s149, %s151
      %p155 = scmp.eq.s32.totalorder %s19, 0
      %p156 = por %p154, %p155
      %p157 = scmp.ne.s32.totalorder %s149, %s151
      %p158 = scmp.eq.s32.totalorder %s24, 1
      %p159 = por %p157, %p158
      %p160 = scmp.ne.s32.totalorder %s151, %s152
      %p161 = scmp.eq.s32.totalorder %s24, 0
      %p162 = por %p160, %p161
      %p163 = scmp.ne.s32.totalorder %s151, %s152
      %p164 = scmp.eq.s32.totalorder %s25, 1
      %p165 = por %p163, %p164
      %p167 = scmp.ne.s32.totalorder %s152, %s166
      %p168 = scmp.eq.s32.totalorder %s25, 0
      %p169 = por %p167, %p168
      %s171 = sadd.s32 %s170, 1
      %p174 = scmp.eq.s32.totalorder %s19, 1
      %p175 = scmp.ne.s32.totalorder %s170, %s172
      %p176 = scmp.eq.s32.totalorder %s19, 0
      %p177 = por %p175, %p176
      %p178 = scmp.ne.s32.totalorder %s170, %s172
      %p179 = scmp.eq.s32.totalorder %s24, 1
      %p180 = por %p178, %p179
      %p181 = scmp.ne.s32.totalorder %s172, %s173
      %p182 = scmp.eq.s32.totalorder %s24, 0
      %p183 = por %p181, %p182
      %p184 = scmp.ne.s32.totalorder %s172, %s173
      %p185 = scmp.eq.s32.totalorder %s25, 1
      %p186 = por %p184, %p185
      %p188 = scmp.ne.s32.totalorder %s173, %s187
      %p189 = scmp.eq.s32.totalorder %s25, 0
      %p190 = por %p188, %p189
      %s192 = sadd.s32 %s191, 1
      %p195 = scmp.eq.s32.totalorder %s19, 1
      %p196 = scmp.ne.s32.totalorder %s191, %s193
      %p197 = scmp.eq.s32.totalorder %s19, 0
      %p198 = por %p196, %p197
      %p199 = scmp.ne.s32.totalorder %s191, %s193
      %p200 = scmp.eq.s32.totalorder %s24, 1
      %p201 = por %p199, %p200
      %p202 = scmp.ne.s32.totalorder %s193, %s194
      %p203 = scmp.eq.s32.totalorder %s24, 0
      %p204 = por %p202, %p203
      %p205 = scmp.ne.s32.totalorder %s193, %s194
      %p206 = scmp.eq.s32.totalorder %s25, 1
      %p207 = por %p205, %p206
      %p209 = scmp.ne.s32.totalorder %s194, %s208
      %p210 = scmp.eq.s32.totalorder %s25, 0
      %p211 = por %p209, %p210
      %s213 = sadd.s32 %s212, 1
      %p216 = scmp.eq.s32.totalorder %s19, 1
      %p217 = scmp.ne.s32.totalorder %s212, %s214
      %p218 = scmp.eq.s32.totalorder %s19, 0
      %p219 = por %p217, %p218
      %p220 = scmp.ne.s32.totalorder %s212, %s214
      %p221 = scmp.eq.s32.totalorder %s24, 1
      %p222 = por %p220, %p221
      %p223 = scmp.ne.s32.totalorder %s214, %s215
      %p224 = scmp.eq.s32.totalorder %s24, 0
      %p225 = por %p223, %p224
      %p226 = scmp.ne.s32.totalorder %s214, %s215
      %p227 = scmp.eq.s32.totalorder %s25, 1
      %p228 = por %p226, %p227
      %p230 = scmp.ne.s32.totalorder %s215, %s229
      %p231 = scmp.eq.s32.totalorder %s25, 0
      %p232 = por %p230, %p231
      %s233 = smul.u32 %s26, %s27
      %s234 = smul.u32 %s38, %s34
      %s235 = ssub.s32 %s233, %s234
      %p236 = scmp.eq.s32.totalorder %s235, 0
      %s238 = sadd.s32 %s237, 1
      %s239 = scalar_select %p236, %s237, %s238
      %p242 = pneg %p236
      %p243 = scmp.eq.s32.totalorder %s19, 1
      %p244 = por %p242, %p243
      %p245 = scmp.ne.s32.totalorder %s237, %s240
      %p246 = scmp.eq.s32.totalorder %s19, 0
      %p247 = por %p245, %p246
      %p248 = scmp.ne.s32.totalorder %s237, %s240
      %p249 = scmp.eq.s32.totalorder %s24, 1
      %p250 = por %p248, %p249
      %p251 = scmp.ne.s32.totalorder %s240, %s241
      %p252 = scmp.eq.s32.totalorder %s24, 0
      %p253 = por %p251, %p252
      %p254 = scmp.ne.s32.totalorder %s240, %s241
      %p255 = scmp.eq.s32.totalorder %s25, 1
      %p256 = por %p254, %p255
      %p258 = scmp.ne.s32.totalorder %s241, %s257
      %p259 = scmp.eq.s32.totalorder %s25, 0
      %p260 = por %p258, %p259
      %p261 = scmp.le.s32.totalorder 1, %s19
      %p262 = scmp.lt.s32.totalorder %s19, 3
      %p263 = pnand %p261, %p262
      %p264 = pneg %p263
      // Predicated region
      $region9: #{tpu_custom_call.1} parent=5 // pred_check
        _
      $region10: #{tpu_custom_call.1} parent=5 // pred_check_branch
        %266 = sbr.rel (%p263) target = $region12
      $region11: #{tpu_custom_call.1} parent=5 // pred_region
        %s267 = ssub.s32 %s19, 1
        // Predicated region
        $region13: #{tpu_custom_call.1} parent=11 // pred_check
          %p268 = pneg %p57
        $region14: #{tpu_custom_call.1} parent=11 // pred_check_branch
          %270 = sbr.rel (%p268) target = $region16
        $region15: #{tpu_custom_call.1} parent=11 // pred_region
          %p271 = scmp.lt.s32.totalorder %s29, 0
          %s272 = scalar_select %p271, %s29, 0
          %s273 = smul.addr %s272, 8
          %s274 = scalar_lea.vmem %s0, %s273
        $region16: #{tpu_custom_call.1} parent=11 // pred_fallthru
          _
        // Predicated region
        $region17: #{tpu_custom_call.1} parent=11 // pred_check
          %p275 = pneg %p78
        $region18: #{tpu_custom_call.1} parent=11 // pred_check_branch
          %277 = sbr.rel (%p275) target = $region20
        $region19: #{tpu_custom_call.1} parent=11 // pred_region
          %279 = vsyncadd [#allocation5], 0
          %s280 = sshll.u32 %s1, 4
          %s281 = int_to_ptr.hbm [resolvable:$true] %s280
          %s282 = sshll.u32 [#allocation4], 4
          %s283 = int_to_ptr.vmem [resolvable:$true] %s282
          %288 = dma.hbm_to_vmem [thread:$0]  %s281, 128, %s283, [#allocation5], 64, 64, 4
        $region20: #{tpu_custom_call.1} parent=11 // pred_fallthru
          _
        // Predicated region
        $region21: #{tpu_custom_call.1} parent=11 // pred_check
          %p289 = pneg %p99
        $region22: #{tpu_custom_call.1} parent=11 // pred_check_branch
          %291 = sbr.rel (%p289) target = $region24
        $region23: #{tpu_custom_call.1} parent=11 // pred_region
          _
        $region24: #{tpu_custom_call.1} parent=11 // pred_fallthru
          _
        // Predicated region
        $region25: #{tpu_custom_call.1} parent=11 // pred_check
          %p292 = pneg %p120
        $region26: #{tpu_custom_call.1} parent=11 // pred_check_branch
          %294 = sbr.rel (%p292) target = $region28
        $region27: #{tpu_custom_call.1} parent=11 // pred_region
          _
        $region28: #{tpu_custom_call.1} parent=11 // pred_fallthru
          _
        // Predicated region
        $region29: #{tpu_custom_call.1} parent=11 // pred_check
          %p295 = pneg %p141
        $region30: #{tpu_custom_call.1} parent=11 // pred_check_branch
          %297 = sbr.rel (%p295) target = $region32
        $region31: #{tpu_custom_call.1} parent=11 // pred_region
          _
        $region32: #{tpu_custom_call.1} parent=11 // pred_fallthru
          _
        // Predicated region
        $region33: #{tpu_custom_call.1} parent=11 // pred_check
          %p298 = pneg %p162
        $region34: #{tpu_custom_call.1} parent=11 // pred_check_branch
          %300 = sbr.rel (%p298) target = $region36
        $region35: #{tpu_custom_call.1} parent=11 // pred_region
          _
        $region36: #{tpu_custom_call.1} parent=11 // pred_fallthru
          _
        // Predicated region
        $region37: #{tpu_custom_call.1} parent=11 // pred_check
          %p301 = pneg %p183
        $region38: #{tpu_custom_call.1} parent=11 // pred_check_branch
          %303 = sbr.rel (%p301) target = $region40
        $region39: #{tpu_custom_call.1} parent=11 // pred_region
          _
        $region40: #{tpu_custom_call.1} parent=11 // pred_fallthru
          _
        // Predicated region
        $region41: #{tpu_custom_call.1} parent=11 // pred_check
          %p304 = pneg %p204
        $region42: #{tpu_custom_call.1} parent=11 // pred_check_branch
          %306 = sbr.rel (%p304) target = $region44
        $region43: #{tpu_custom_call.1} parent=11 // pred_region
          _
        $region44: #{tpu_custom_call.1} parent=11 // pred_fallthru
          _
        // Predicated region
        $region45: #{tpu_custom_call.1} parent=11 // pred_check
          %p307 = pneg %p225
        $region46: #{tpu_custom_call.1} parent=11 // pred_check_branch
          %309 = sbr.rel (%p307) target = $region48
        $region47: #{tpu_custom_call.1} parent=11 // pred_region
          _
        $region48: #{tpu_custom_call.1} parent=11 // pred_fallthru
          _
      $region12: #{tpu_custom_call.1} parent=5 // pred_fallthru
        _
      %p310 = scmp.lt.s32.totalorder %s19, 2
      // Predicated region
      $region49: #{tpu_custom_call.1} parent=5 // pred_check
        %p311 = pneg %p310
      $region50: #{tpu_custom_call.1} parent=5 // pred_check_branch
        %313 = sbr.rel (%p311) target = $region52
      $region51: #{tpu_custom_call.1} parent=5 // pred_region
        _
      $region52: #{tpu_custom_call.1} parent=5 // pred_fallthru
        _
      %p314 = scmp.le.s32.totalorder 1, %s19
      %p315 = scmp.lt.s32.totalorder %s19, 3
      %p316 = pnand %p314, %p315
      %p317 = pneg %p316
      // Predicated region
      $region53: #{tpu_custom_call.1} parent=5 // pred_check
        _
      $region54: #{tpu_custom_call.1} parent=5 // pred_check_branch
        %319 = sbr.rel (%p316) target = $region56
      $region55: #{tpu_custom_call.1} parent=5 // pred_region
        %s320 = ssub.s32 %s19, 1
        // Predicated region
        $region57: #{tpu_custom_call.1} parent=55 // pred_check
          %p321 = pneg %p78
        $region58: #{tpu_custom_call.1} parent=55 // pred_check_branch
          %323 = sbr.rel (%p321) target = $region60
        $region59: #{tpu_custom_call.1} parent=55 // pred_region
          %325 = dma.done [#allocation5], 128
        $region60: #{tpu_custom_call.1} parent=55 // pred_fallthru
          _
        %p326 = scmp.lt.s32.totalorder %s29, 0
        %s327 = scalar_select %p326, %s29, 0
        %s328 = smul.addr %s327, 8
        %s329 = scalar_lea.vmem %s0, %s328
        %p330 = pneg %p57
        %p331 = pneg %p54
        %p332 = pneg %p78
        %p333 = pneg %p75
        %p334 = pneg %p99
        %p335 = pneg %p96
        %p336 = pneg %p120
        %p337 = pneg %p117
        %p338 = pneg %p141
        %p339 = pneg %p138
        %p340 = pneg %p162
        %p341 = pneg %p159
        %p342 = pneg %p183
        %p343 = pneg %p180
        %p344 = pneg %p204
        %p345 = pneg %p201
        %p346 = pneg %p225
        %p347 = pneg %p222
        %p348 = pneg %p253
        %p349 = pneg %p250
        %s350 = sand.u32 %s240, 1
        %s351 = scalar_lea.sflag [#allocation6], %s350
        %s352 = sand.u32 %s240, 1
        %s353 = smul.addr %s352, 8
        %s354 = scalar_lea.vmem [#allocation7], %s353
        %p355 = scmp.lt.s32.totalorder %s29, 0
        %s356 = scalar_select %p355, %s29, 0
        %s357 = smul.addr %s356, 8
        %s358 = scalar_lea.vmem %s0, %s357
        %s359 = smul.u32 %s28, %s29
        %v361 = vlaneseq
        %v362 = vshrl.u32 %v361, 7
        %s363 = smul.u32 %s29, 8
        %v364 = vstv %s363
        %v365 = vadd.s32 %v362, %v364
        %vm366 = vcmp.lt.s32.totalorder %v365, 8
        %v367 = vld [vmem:[%s358] sm:$0xff]
        %v368 = vpack.c.bf16 %v367, %v367
        %v369 = vld [vmem:[#allocation4] sm:$0xf]
        %v370 = vld [vmem:[#allocation4 + $0x4] sm:$0xf]
        %v371 = vld [vmem:[%s2] sm:$0x1]
        %v373 = vperm.slane %v371, 0
        %v377 = vunpack.c.l.b16 %v369
        %v378 = vunpack.c.l.b16 %v370
        %v379 = vpack.c.b16 %v378, %v377
        %vm381 = vcmask 130048
        %v383 = vsel %vm381, %v368, 0
        %385 = vmatpush.bf16.msra.mxu0 0
        %386 = vmatpush.bf16.msra.mxu0 0
        %387 = vmatpush.bf16.msra.mxu0 0
        %388 = vmatpush.bf16.msra.mxu0 0
        %389 = vmatpush.bf16.msra.mxu0 0
        %390 = vmatpush.bf16.msra.mxu0 0
        %391 = vmatpush.bf16.msra.mxu0 0
        %392 = vmatpush.bf16.msra.mxu0 %v379
        %393 = vmatmul.bf16.gmra.mxu0 %v383
        %v394 = vpop.f32.mrf.mxu0
        %v395 = vadd.f32 %v373, %v394
        %v396 = vpop.f32.mrf.mxu0
        %397 = vdwg.mxu0
        %p398 = scmp.eq.s32.totalorder %s28, 0
        // Predicated region
        $region61: #{tpu_custom_call.1} parent=55 // pred_check
          %p399 = pneg %p398
        $region62: #{tpu_custom_call.1} parent=55 // pred_check_branch
          %401 = sbr.rel (%p399) target = $region64
        $region63: #{tpu_custom_call.1} parent=55 // pred_region
          %p402 = scmp.eq.s32.totalorder %s29, 0
          // Predicated region
          $region65: #{tpu_custom_call.1} parent=63 // pred_check
            %p403 = pneg %p402
          $region66: #{tpu_custom_call.1} parent=63 // pred_check_branch
            %405 = sbr.rel (%p403) target = $region68
          $region67: #{tpu_custom_call.1} parent=63 // pred_region
            %406 = vst [vmem:[#allocation2] sm:$0x1] 0.0
            %407 = vst [vmem:[#allocation3] sm:$0x1] 0.0
          $region68: #{tpu_custom_call.1} parent=63 // pred_fallthru
            _
          %v408 = vsel %vm366, 1, 0
          %vm409 = vcmp.eq.s32.totalorder %v408, 1
          %v410 = vsel %vm409, %v395, 0.0
          %v411 = vld [vmem:[#allocation2] sm:$0x1]
          %v412 = vrot.slane %v410, 4
          %v413 = vadd.f32 %v410, %v412
          %v414 = vrot.slane %v413, 2
          %v415 = vadd.f32 %v413, %v414
          %v416 = vrot.slane %v415, 1
          %v417 = vadd.f32 %v415, %v416
          %v418 = vadd.f32 %v411, %v417
          %419 = vst [vmem:[#allocation2] sm:$0x1] %v418
          %v420 = vld [vmem:[#allocation3] sm:$0x1]
          %v421 = vmul.f32 %v410, %v410
          %v422 = vrot.slane %v421, 4
          %v423 = vadd.f32 %v421, %v422
          %v424 = vrot.slane %v423, 2
          %v425 = vadd.f32 %v423, %v424
          %v426 = vrot.slane %v425, 1
          %v427 = vadd.f32 %v425, %v426
          %v428 = vadd.f32 %v420, %v427
          %429 = vst [vmem:[#allocation3] sm:$0x1] %v428
        $region64: #{tpu_custom_call.1} parent=55 // pred_fallthru
          _
        %p430 = scmp.eq.s32.totalorder %s28, 1
        // Predicated region
        $region69: #{tpu_custom_call.1} parent=55 // pred_check
          %p431 = pneg %p430
        $region70: #{tpu_custom_call.1} parent=55 // pred_check_branch
          %433 = sbr.rel (%p431) target = $region72
        $region71: #{tpu_custom_call.1} parent=55 // pred_region
          %v434 = vld [vmem:[#allocation2] sm:$0x1]
          %v435 = vmul.f32 %v434, 0.125
          %v436 = vld [vmem:[#allocation3] sm:$0x1]
          %v437 = vmul.f32 %v436, 0.125
          %v438 = vmul.f32 %v435, %v435
          %v439 = vsub.f32 %v437, %v438
          %v440 = vmax.f32 %v439, 0.0
          %v441 = vld [vmem:[%s3] sm:$0x1]
          %v442 = vadd.f32 %v440, 1e-05
          %v443 = vrsqrt.pop %v442
          %v444 = vmul.f32 %v443, %v442
          %v445 = vmul.f32 %v444, %v443
          %v446 = vmul.f32 0.5, %v445
          %v447 = vsub.f32 1.5, %v446
          %v448 = vmul.f32 %v443, %v447
          %vm449 = vweird.f32 %v442
          %vm450 = vweird.f32 %v443
          %vm451 = vmor %vm449, %vm450
          %v452 = vsel %vm451, %v443, %v448
          %v453 = vmul.f32 %v441, %v452
          %v454 = vld [vmem:[%s4] sm:$0x1]
          %v455 = vmul.f32 %v435, %v453
          %v456 = vsub.f32 %v454, %v455
          %v458 = vperm.slane %v453, 0
          %v460 = vmul.f32 %v395, %v458
          %v462 = vperm.slane %v456, 0
          %v464 = vadd.f32 %v460, %v462
          %v465 = vmax.f32 %v464, 0.0
          %v466 = vpack.c.bf16 %v465, %v465
          %v467 = vld [vmem:[%s5] sm:$0xf]
          %v468 = vld [vmem:[%s5 + $0x4] sm:$0xf]
          %v469 = vld [vmem:[%s5 + $0x8] sm:$0xf]
          %v470 = vld [vmem:[%s5 + $0xc] sm:$0xf]
          %v471 = vld [vmem:[%s5 + $0x10] sm:$0xf]
          %v472 = vld [vmem:[%s5 + $0x14] sm:$0xf]
          %v473 = vld [vmem:[%s5 + $0x18] sm:$0xf]
          %v474 = vld [vmem:[%s5 + $0x1c] sm:$0xf]
          %v475 = vld [vmem:[%s5 + $0x20] sm:$0xf]
          %v476 = vld [vmem:[%s5 + $0x24] sm:$0xf]
          %v477 = vld [vmem:[%s5 + $0x28] sm:$0xf]
          %v478 = vld [vmem:[%s5 + $0x2c] sm:$0xf]
          %v479 = vld [vmem:[%s5 + $0x30] sm:$0xf]
          %v480 = vld [vmem:[%s5 + $0x34] sm:$0xf]
          %v481 = vld [vmem:[%s5 + $0x38] sm:$0xf]
          %v482 = vld [vmem:[%s5 + $0x3c] sm:$0xf]
          %v483 = vld [vmem:[%s6] sm:$0x1]
          %v485 = vperm.slane %v483, 0
          %v503 = vunpack.c.l.b16 %v467
          %v504 = vunpack.c.l.b16 %v468
          %v505 = vunpack.c.l.b16 %v469
          %v506 = vunpack.c.l.b16 %v470
          %v507 = vunpack.c.l.b16 %v471
          %v508 = vunpack.c.l.b16 %v472
          %v509 = vunpack.c.l.b16 %v473
          %v510 = vunpack.c.l.b16 %v474
          %v511 = vunpack.c.l.b16 %v475
          %v512 = vunpack.c.l.b16 %v476
          %v513 = vunpack.c.l.b16 %v477
          %v514 = vunpack.c.l.b16 %v478
          %v515 = vunpack.c.l.b16 %v479
          %v516 = vunpack.c.l.b16 %v480
          %v517 = vunpack.c.l.b16 %v481
          %v518 = vunpack.c.l.b16 %v482
          %v519 = vpack.c.b16 %v504, %v503
          %v520 = vpack.c.b16 %v506, %v505
          %v521 = vpack.c.b16 %v508, %v507
          %v522 = vpack.c.b16 %v510, %v509
          %v523 = vpack.c.b16 %v512, %v511
          %v524 = vpack.c.b16 %v514, %v513
          %v525 = vpack.c.b16 %v516, %v515
          %v526 = vpack.c.b16 %v518, %v517
          %535 = vmatpush.bf16.msra.mxu0 %v526
          %536 = vmatpush.bf16.msra.mxu0 %v525
          %537 = vmatpush.bf16.msra.mxu0 %v524
          %538 = vmatpush.bf16.msra.mxu0 %v523
          %539 = vmatpush.bf16.msra.mxu0 %v522
          %540 = vmatpush.bf16.msra.mxu0 %v521
          %541 = vmatpush.bf16.msra.mxu0 %v520
          %542 = vmatpush.bf16.msra.mxu0 %v519
          %543 = vmatmul.bf16.gmra.mxu0 %v466
          %v544 = vpop.f32.mrf.mxu0
          %v545 = vadd.f32 %v485, %v544
          %v546 = vpop.f32.mrf.mxu0
          %547 = vdwg.mxu0
          %v548 = vmax.f32 %v545, 0.0
          %v549 = vpack.c.bf16 %v548, %v548
          %v550 = vld [vmem:[%s7] sm:$0xf]
          %v551 = vld [vmem:[%s7 + $0x4] sm:$0xf]
          %v552 = vld [vmem:[%s7 + $0x8] sm:$0xf]
          %v553 = vld [vmem:[%s7 + $0xc] sm:$0xf]
          %v554 = vld [vmem:[%s7 + $0x10] sm:$0xf]
          %v555 = vld [vmem:[%s7 + $0x14] sm:$0xf]
          %v556 = vld [vmem:[%s7 + $0x18] sm:$0xf]
          %v557 = vld [vmem:[%s7 + $0x1c] sm:$0xf]
          %v558 = vld [vmem:[%s7 + $0x20] sm:$0xf]
          %v559 = vld [vmem:[%s7 + $0x24] sm:$0xf]
          %v560 = vld [vmem:[%s7 + $0x28] sm:$0xf]
          %v561 = vld [vmem:[%s7 + $0x2c] sm:$0xf]
          %v562 = vld [vmem:[%s7 + $0x30] sm:$0xf]
          %v563 = vld [vmem:[%s7 + $0x34] sm:$0xf]
          %v564 = vld [vmem:[%s7 + $0x38] sm:$0xf]
          %v565 = vld [vmem:[%s7 + $0x3c] sm:$0xf]
          %v566 = vld [vmem:[%s8] sm:$0x1]
          %v568 = vperm.slane %v566, 0
          %v586 = vunpack.c.l.b16 %v550
          %v587 = vunpack.c.l.b16 %v551
          %v588 = vunpack.c.l.b16 %v552
          %v589 = vunpack.c.l.b16 %v553
          %v590 = vunpack.c.l.b16 %v554
          %v591 = vunpack.c.l.b16 %v555
          %v592 = vunpack.c.l.b16 %v556
          %v593 = vunpack.c.l.b16 %v557
          %v594 = vunpack.c.l.b16 %v558
          %v595 = vunpack.c.l.b16 %v559
          %v596 = vunpack.c.l.b16 %v560
          %v597 = vunpack.c.l.b16 %v561
          %v598 = vunpack.c.l.b16 %v562
          %v599 = vunpack.c.l.b16 %v563
          %v600 = vunpack.c.l.b16 %v564
          %v601 = vunpack.c.l.b16 %v565
          %v602 = vpack.c.b16 %v587, %v586
          %v603 = vpack.c.b16 %v589, %v588
          %v604 = vpack.c.b16 %v591, %v590
          %v605 = vpack.c.b16 %v593, %v592
          %v606 = vpack.c.b16 %v595, %v594
          %v607 = vpack.c.b16 %v597, %v596
          %v608 = vpack.c.b16 %v599, %v598
          %v609 = vpack.c.b16 %v601, %v600
          %618 = vmatpush.bf16.msra.mxu0 %v609
          %619 = vmatpush.bf16.msra.mxu0 %v608
          %620 = vmatpush.bf16.msra.mxu0 %v607
          %621 = vmatpush.bf16.msra.mxu0 %v606
          %622 = vmatpush.bf16.msra.mxu0 %v605
          %623 = vmatpush.bf16.msra.mxu0 %v604
          %624 = vmatpush.bf16.msra.mxu0 %v603
          %625 = vmatpush.bf16.msra.mxu0 %v602
          %626 = vmatmul.bf16.gmra.mxu0 %v549
          %v627 = vpop.f32.mrf.mxu0
          %v628 = vadd.f32 %v568, %v627
          %v629 = vpop.f32.mrf.mxu0
          %630 = vdwg.mxu0
          %v631 = vlaneseq
          %v632 = vand.u32 %v631, 127
          %vm633 = vcmp.lt.s32.totalorder %v632, 8
          %v634 = vmul.f32 %v628, %v628
          %v635 = vsel %vm381, %v634, 0.0
          %636 = vadd.xlane.f32.xlu0 %v635
          %v637 = vpop.xlane.xlu0 %636
          %v638 = vsel %vm633, %v634, 0.0
          %v639 = vsel %vm381, %v638, 0.0
          %640 = vadd.xlane.f32.xlu0 %v639
          %v641 = vpop.xlane.xlu0 %640
          %v642 = vsub.f32 %v637, %v641
          %v643 = vmax.f32 %v641, 1e-24
          %v644 = vrsqrt.pop %v643
          %v645 = vmul.f32 %v644, %v643
          %v646 = vmul.f32 %v645, %v644
          %v647 = vmul.f32 0.5, %v646
          %v648 = vsub.f32 1.5, %v647
          %v649 = vmul.f32 %v644, %v648
          %vm650 = vweird.f32 %v643
          %vm651 = vweird.f32 %v644
          %vm652 = vmor %vm650, %vm651
          %v653 = vsel %vm652, %v644, %v649
          %v654 = vmax.f32 %v642, 1e-24
          %v655 = vrsqrt.pop %v654
          %v656 = vmul.f32 %v655, %v654
          %v657 = vmul.f32 %v656, %v655
          %v658 = vmul.f32 0.5, %v657
          %v659 = vsub.f32 1.5, %v658
          %v660 = vmul.f32 %v655, %v659
          %vm661 = vweird.f32 %v654
          %vm662 = vweird.f32 %v655
          %vm663 = vmor %vm661, %vm662
          %v664 = vsel %vm663, %v655, %v660
          %v665 = vsel %vm633, %v653, %v664
          %v666 = vmul.f32 %v628, %v665
          %667 = vst.msk [vmem:[%s354] sm:$0xff] %vm381, %v666
        $region72: #{tpu_custom_call.1} parent=55 // pred_fallthru
          _
        %s668 = sand.u32 %s240, 1
        %s669 = scalar_lea.sflag [#allocation6], %s668
        %s670 = sand.u32 %s240, 1
        %s671 = smul.addr %s670, 8
        %s672 = scalar_lea.vmem [#allocation7], %s671
        // Predicated region
        $region73: #{tpu_custom_call.1} parent=55 // pred_check
          %p673 = pneg %p250
        $region74: #{tpu_custom_call.1} parent=55 // pred_check_branch
          %675 = sbr.rel (%p673) target = $region76
        $region75: #{tpu_custom_call.1} parent=55 // pred_region
          %s676 = smul.u32 %s28, %s29
          %678 = vsyncadd %s669, 0
          %s679 = smul.addr %s676, 8
          %s680 = scalar_lea.hbm %s9, %s679
          %s682 = sshll.u32 %s672, 4
          %s683 = int_to_ptr.vmem [resolvable:$true] %s682
          %s684 = sshll.u32 %s680, 4
          %s685 = int_to_ptr.hbm [resolvable:$true] %s684
          %687 = dma.vmem_to_hbm [thread:$0]  %s683, 128, %s685, %s669
        $region76: #{tpu_custom_call.1} parent=55 // pred_fallthru
          _
      $region56: #{tpu_custom_call.1} parent=5 // pred_fallthru
        _
      %p688 = scmp.le.s32.totalorder 2, %s19
      // Predicated region
      $region77: #{tpu_custom_call.1} parent=5 // pred_check
        %p689 = pneg %p688
      $region78: #{tpu_custom_call.1} parent=5 // pred_check_branch
        %691 = sbr.rel (%p689) target = $region80
      $region79: #{tpu_custom_call.1} parent=5 // pred_region
        %s692 = ssub.s32 %s19, 2
        // Predicated region
        $region81: #{tpu_custom_call.1} parent=79 // pred_check
          %p693 = pneg %p256
        $region82: #{tpu_custom_call.1} parent=79 // pred_check_branch
          %695 = sbr.rel (%p693) target = $region84
        $region83: #{tpu_custom_call.1} parent=79 // pred_region
          %s696 = sand.u32 %s241, 1
          %s697 = scalar_lea.sflag [#allocation6], %s696
          %s698 = sand.u32 %s241, 1
          %s699 = smul.addr %s698, 8
          %s700 = scalar_lea.vmem [#allocation7], %s699
          %702 = dma.done %s697, 128
        $region84: #{tpu_custom_call.1} parent=79 // pred_fallthru
          _
      $region80: #{tpu_custom_call.1} parent=5 // pred_fallthru
        _
    $region6: #{tpu_custom_call.1} parent=1 // loop_footer
      %s23 = sadd.s32 1, %s19
    $region7: #{tpu_custom_call.1} parent=1 // loop_footer_branch
      %18 = sbr.rel target = $region3
    $region8: #{tpu_custom_call.1} parent=1 // loop_exit
      _
    %703 = vsyncpa [#allocation5], 1
    %s704 = scalar_lea.sflag [#allocation5], 1
    %705 = vsyncpa %s704, 1
    %706 = vsyncpa [#allocation6], 1
    %s707 = scalar_lea.sflag [#allocation6], 1
    %708 = vsyncpa %s707, 1

</llo_original>
